<compile_context>
chip_gen: v6e
topology: v6e:2x2x1
jax: 0.10.0
libtpu: 0.0.40
codegen_flags: <defaults>
</compile_context>

<pallas_src>
import jax
import jax.numpy as jnp
from jax.experimental import pallas as pl
from jax.experimental.pallas import tpu as pltpu


def _vmem_limit_bytes():
    """Generation-aware VMEM budget: physical capacity minus ~8 MiB headroom."""
    try:
        cap = getattr(pltpu.get_tpu_info(), "vmem_capacity_bytes", None)
        if cap:
            return int(min(int(cap) - (8 << 20), 112 << 20))
    except Exception:
        pass
    return 48 << 20


def make_vip_embeddings(*, image_size, patch_size, temporal_size, add_cls_num,
                        hidden, if_use_temporal_embed=True,
                        frames_per_block=None, out_dtype=jnp.float32):
    P = patch_size
    D = hidden
    C = 3
    Hp = image_size // P
    L = Hp * Hp                                  # patches per frame
    Cpp = C * P * P                              # conv contraction length
    Cpp_pad = ((Cpp + 127) // 128) * 128         # lane-align the K dim
    M = 1 + add_cls_num                          # cls + added-cls tokens
    num_positions = L + 1

    def _pick_ft(T):
        """Frames per grid step: largest divisor of T giving <= ~512 tokens."""
        if frames_per_block is not None:
            ft = frames_per_block
        else:
            ft = 1
            for cand in range(1, T + 1):
                if T % cand == 0 and cand * L <= max(512, L):
                    ft = cand
        assert T % ft == 0, "frames_per_block must divide the clip length"
        assert (ft * L) % 8 == 0 or ft == T, \
            "tokens per grid step must be a multiple of 8 (or cover all frames)"
        return ft

    def _interp_time_embed(te, T):
        Ts = te.shape[1]
        if Ts == T:
            return te
        # TODO(synk): mirrors F.interpolate(mode='linear', align_corners=False)
        # (half-pixel convention); only the Ts == T branch is exercised in-test.
        scale = Ts / T
        src = (jnp.arange(T, dtype=jnp.float32) + 0.5) * scale - 0.5
        src = jnp.maximum(src, 0.0)
        lo = jnp.floor(src).astype(jnp.int32)
        hi = jnp.minimum(lo + 1, Ts - 1)
        frac = (src - lo.astype(jnp.float32))[:, None]
        return ((1.0 - frac) * te[0, lo] + frac * te[0, hi])[None]

    def apply(pixel_values, params):
        B, T, Cin, Himg, Wimg = pixel_values.shape
        assert Cin == C and Himg == image_size and Wimg == image_size
        TL = T * L
        Tout = M + TL
        ft = _pick_ft(T)
        TPB = ft * L                              # tokens per grid step
        n_tok = T // ft                           # token-tile (frame-block) steps

        # ---- patchify: cast to bf16 FIRST, then pure layout plumbing ----
        pv = pixel_values.astype(jnp.bfloat16)
        x = pv.reshape(B, T, C, Hp, P, Hp, P)
        x = x.transpose(0, 1, 3, 5, 2, 4, 6)      # (B, T, hp, wp, c, i, j)
        patches = x.reshape(B, TL, Cpp)
        if Cpp_pad != Cpp:
            patches = jnp.pad(patches, ((0, 0), (0, 0), (0, Cpp_pad - Cpp)))

        w = params['patch_weight']                                # (D, C, P, P)
        w_mat = w.transpose(1, 2, 3, 0).reshape(Cpp, D).astype(jnp.bfloat16)
        if Cpp_pad != Cpp:
            w_mat = jnp.pad(w_mat, ((0, Cpp_pad - Cpp), (0, 0)))

        pos = params['position_embedding']                        # (L+1, D)
        assert pos.shape[0] == num_positions
        pos0 = pos[0:1].astype(jnp.float32)                       # (1, D)
        pos_patch = pos[1:1 + L].astype(jnp.float32)              # (L, D)

        if if_use_temporal_embed:
            time_full = _interp_time_embed(
                params['temporal_embedding'], T)[0].astype(jnp.float32)  # (T, D)
        else:
            time_full = jnp.zeros((T, D), jnp.float32)
        time_blocks = time_full.reshape(n_tok, ft, D)             # exact per-step rows

        prefix = (jnp.concatenate(
            [params['class_embedding'][None, :], params['added_cls']], axis=0)
            + pos0).astype(jnp.float32)                           # (M, D)

        # ---------------- Pallas kernel ----------------
        def kernel(patches_ref, w_ref, time_ref, pos_ref, prefix_ref, out_ref):
            j = pl.program_id(1)

            # Prefix rows (cls + added-cls + pos[0]); written once per batch row.
            @pl.when(j == 0)
            def _():
                out_ref[0:M, :] = prefix_ref[...].astype(out_ref.dtype)

            # Patch conv == one bf16 MXU matmul with f32 accumulation.
            pe = jnp.dot(patches_ref[...], w_ref[...],
                         preferred_element_type=jnp.float32)      # (TPB, D)
            te = time_ref[...]                                    # (ft, D)
            if ft == 1:
                pe = pe + te + pos_ref[...]
            else:
                pe = (pe.reshape(ft, L, D) + te[:, None, :]
                      + pos_ref[...][None, :, :]).reshape(TPB, D)
            # Direct sub-slice store (no concat temp); the output block is
            # resident across the token axis, written back to HBM once per row.
            out_ref[pl.ds(M + j * TPB, TPB), :] = pe.astype(out_ref.dtype)

        embeds = pl.pallas_call(
            kernel,
            out_shape=jax.ShapeDtypeStruct((B, Tout, D), out_dtype),
            grid=(B, n_tok),
            in_specs=[
                # Patches: batch dim squeezed -> kernel sees a 2-D MXU operand.
                pl.BlockSpec((None, TPB, Cpp_pad), lambda b, j: (b, j, 0)),
                pl.BlockSpec((Cpp_pad, D), lambda b, j: (0, 0)),   # weights (const)
                pl.BlockSpec((None, ft, D), lambda b, j: (j, 0, 0)),  # time rows
                pl.BlockSpec((L, D), lambda b, j: (0, 0)),         # pos (const)
                pl.BlockSpec((M, D), lambda b, j: (0, 0)),         # prefix (const)
            ],
            out_specs=pl.BlockSpec((None, Tout, D), lambda b, j: (b, 0, 0)),
            compiler_params=pltpu.CompilerParams(
                dimension_semantics=("parallel", "arbitrary"),
                vmem_limit_bytes=_vmem_limit_bytes()),
        )(patches, w_mat, time_blocks, pos_patch, prefix)

        return embeds, (M, T, L)

    return apply


def reference(pixel_values, params, *, patch_size, add_cls_num,
              if_use_temporal_embed=True):
    """Pure-JAX transcription of CLIPVisionViPEmbeddings.forward (f32)."""
    B, T, C, H, W = pixel_values.shape
    P = patch_size
    w = params['patch_weight']
    D = w.shape[0]
    pe = jax.lax.conv_general_dilated(
        pixel_values.reshape(B * T, C, H, W), w,
        window_strides=(P, P), padding='VALID',
        dimension_numbers=('NCHW', 'OIHW', 'NCHW'),
        precision=jax.lax.Precision.HIGHEST)                 # (B*T, D, Hp, Wp)
    L = pe.shape[2] * pe.shape[3]
    pe = pe.reshape(B * T, D, L).transpose(0, 2, 1)          # flatten(2).T
    pe = pe.reshape(B, T, L, D)
    pos = params['position_embedding']
    if if_use_temporal_embed:
        te = params['temporal_embedding']
        assert te.shape[1] == T
        pe = pe + te[:, :, None, :]
    pe = pe + pos[None, None, 1:1 + L, :]
    cls = (jnp.broadcast_to(params['class_embedding'][None, None, :], (B, 1, D))
           + pos[None, 0:1, :])
    added = (jnp.broadcast_to(params['added_cls'][None], (B, add_cls_num, D))
             + pos[None, 0:1, :])
    M = 1 + add_cls_num
    embeds = jnp.concatenate([cls, added, pe.reshape(B, T * L, D)], axis=1)
    return embeds, (M, T, L)


if __name__ == "__main__":
    # Small config consistent with the module; exercises the multi-step token
    # axis (pl.when prefix write, dynamic patch-row stores) and ft > 1.
    B, T = 2, 4                       # batch, frames
    image_size, patch_size = 16, 4    # -> L = 16 patches per frame
    D = 32                            # hidden size
    add_cls_num = 3                   # -> M = 4 proxy/cls tokens
    temporal_size = 4

    L = (image_size // patch_size) ** 2
    num_positions = L + 1

    key = jax.random.PRNGKey(0)
    kx, kw, kc, ka, kp, kt = jax.random.split(key, 6)
    params = {
        'patch_weight': 0.02 * jax.random.normal(
            kw, (D, 3, patch_size, patch_size), jnp.float32),
        'class_embedding': jax.random.normal(kc, (D,), jnp.float32),
        'added_cls': jax.random.normal(ka, (add_cls_num, D), jnp.float32),
        'position_embedding': 0.02 * jax.random.normal(
            kp, (num_positions, D), jnp.float32),
        'temporal_embedding': 0.02 * jax.random.normal(
            kt, (1, temporal_size, D), jnp.float32),
    }

    pixel_values = jax.random.normal(kx, (B, T, 3, image_size, image_size),
                                     jnp.float32)

    embed_fn = make_vip_embeddings(
        image_size=image_size, patch_size=patch_size,
        temporal_size=temporal_size, add_cls_num=add_cls_num,
        hidden=D, if_use_temporal_embed=True, frames_per_block=2)

    out, (M, N, Lp) = embed_fn(pixel_values, params)
    out = jax.block_until_ready(out)

    ref, (Mr, Nr, Lr) = reference(pixel_values, params, patch_size=patch_size,
                                  add_cls_num=add_cls_num,
                                  if_use_temporal_embed=True)
    err = float(jnp.max(jnp.abs(out - ref)))
    if not (err < 2e-2):
        raise AssertionError(f"kernel mismatch vs reference, max abs err = {err}")
    assert (M, N, Lp) == (Mr, Nr, Lr) == (1 + add_cls_num, T, L)

    print("KERNEL_OK")
</pallas_src>

<mosaic_0001>
module attributes {stable_mosaic.version = 11 : i64} {
  func.func @kernel(%arg0: i32, %arg1: i32, %arg2: memref<1x32x128xbf16, #tpu.memory_space<vmem>>, %arg3: memref<128x32xbf16, #tpu.memory_space<vmem>>, %arg4: memref<1x2x32xf32, #tpu.memory_space<vmem>>, %arg5: memref<16x32xf32, #tpu.memory_space<vmem>>, %arg6: memref<4x32xf32, #tpu.memory_space<vmem>>, %arg7: memref<1x68x32xf32, #tpu.memory_space<vmem>>) attributes {dimension_semantics = [#tpu.dimension_semantics<parallel>, #tpu.dimension_semantics<arbitrary>], iteration_bounds = array<i64: 2, 2>, scalar_prefetch = 0 : i64, scratch_operands = 0 : i64, tpu.core_type = #tpu.core_type<tc>, window_params = [{transform_indices = @transform_0, window_bounds = array<i64: 1, 32, 128>}, {pipeline_mode = #tpu.pipeline_mode<synchronous>, transform_indices = @transform_1, window_bounds = array<i64: 128, 32>}, {transform_indices = @transform_2, window_bounds = array<i64: 1, 2, 32>}, {pipeline_mode = #tpu.pipeline_mode<synchronous>, transform_indices = @transform_3, window_bounds = array<i64: 16, 32>}, {pipeline_mode = #tpu.pipeline_mode<synchronous>, transform_indices = @transform_4, window_bounds = array<i64: 4, 32>}, {transform_indices = @transform_5, window_bounds = array<i64: 1, 68, 32>}]} {
    %c0_i32 = arith.constant 0 : i32
    %0 = arith.cmpi eq, %arg1, %c0_i32 : i32
    %1 = arith.extui %0 : i1 to i32
    %c0_i32_0 = arith.constant 0 : i32
    %2 = arith.cmpi ne, %1, %c0_i32_0 : i32
    scf.if %2 {
      %c0_12 = arith.constant 0 : index
      %c0_13 = arith.constant 0 : index
      %24 = vector.load %arg6[%c0_12, %c0_13] : memref<4x32xf32, #tpu.memory_space<vmem>>, vector<4x32xf32>
      %c0_14 = arith.constant 0 : index
      %c0_15 = arith.constant 0 : index
      %c0_16 = arith.constant 0 : index
      %25 = vector.load %arg7[%c0_14, %c0_15, %c0_16] : memref<1x68x32xf32, #tpu.memory_space<vmem>>, vector<1x4x32xf32>
      %26 = vector.shape_cast %25 : vector<1x4x32xf32> to vector<4x32xf32>
      %27 = vector.shape_cast %24 : vector<4x32xf32> to vector<1x4x32xf32>
      tpu.vector_store %arg7[%c0_14, %c0_15, %c0_16], %27 {strides = array<i32>} : memref<1x68x32xf32, #tpu.memory_space<vmem>>, vector<1x4x32xf32>,
    } else {
    }
    %c0 = arith.constant 0 : index
    %c0_1 = arith.constant 0 : index
    %c0_2 = arith.constant 0 : index
    %3 = vector.load %arg2[%c0, %c0_1, %c0_2] : memref<1x32x128xbf16, #tpu.memory_space<vmem>>, vector<1x32x128xbf16>
    %4 = vector.shape_cast %3 : vector<1x32x128xbf16> to vector<32x128xbf16>
    %c0_3 = arith.constant 0 : index
    %c0_4 = arith.constant 0 : index
    %5 = vector.load %arg3[%c0_3, %c0_4] : memref<128x32xbf16, #tpu.memory_space<vmem>>, vector<128x32xbf16>
    %cst = arith.constant dense<0.000000e+00> : vector<32x32xf32>
    %6 = tpu.matmul %4, %5, %cst {dimension_numbers = #tpu.dot_dimension_numbers<[1], [0], [0], [1], [0, 0, 1, 1], [], []>} : vector<32x128xbf16>, vector<128x32xbf16>, vector<32x32xf32> -> vector<32x32xf32>
    %c0_5 = arith.constant 0 : index
    %c0_6 = arith.constant 0 : index
    %c0_7 = arith.constant 0 : index
    %7 = vector.load %arg4[%c0_5, %c0_6, %c0_7] : memref<1x2x32xf32, #tpu.memory_space<vmem>>, vector<1x2x32xf32>
    %8 = vector.shape_cast %7 : vector<1x2x32xf32> to vector<2x32xf32>
    %9 = vector.shape_cast %6 : vector<32x32xf32> to vector<2x16x32xf32>
    %10 = vector.shape_cast %8 : vector<2x32xf32> to vector<2x1x32xf32>
    %11 = vector.broadcast %10 : vector<2x1x32xf32> to vector<2x16x32xf32>
    %12 = arith.addf %9, %11 : vector<2x16x32xf32>
    %c0_8 = arith.constant 0 : index
    %c0_9 = arith.constant 0 : index
    %13 = vector.load %arg5[%c0_8, %c0_9] : memref<16x32xf32, #tpu.memory_space<vmem>>, vector<16x32xf32>
    %14 = vector.shape_cast %13 : vector<16x32xf32> to vector<1x16x32xf32>
    %15 = vector.broadcast %14 : vector<1x16x32xf32> to vector<2x16x32xf32>
    %16 = arith.addf %12, %15 : vector<2x16x32xf32>
    %17 = vector.shape_cast %16 : vector<2x16x32xf32> to vector<32x32xf32>
    %c32_i32 = arith.constant 32 : i32
    %18 = arith.muli %arg1, %c32_i32 : i32
    %c4_i32 = arith.constant 4 : i32
    %19 = arith.addi %c4_i32, %18 : i32
    %c0_10 = arith.constant 0 : index
    %20 = arith.index_cast %19 : i32 to index
    %c0_11 = arith.constant 0 : index
    %21 = vector.load %arg7[%c0_10, %20, %c0_11] : memref<1x68x32xf32, #tpu.memory_space<vmem>>, vector<1x32x32xf32>
    %22 = vector.shape_cast %21 : vector<1x32x32xf32> to vector<32x32xf32>
    %23 = vector.shape_cast %17 : vector<32x32xf32> to vector<1x32x32xf32>
    tpu.vector_store %arg7[%c0_10, %20, %c0_11], %23 {strides = array<i32>} : memref<1x68x32xf32, #tpu.memory_space<vmem>>, vector<1x32x32xf32>,
    return
  }
  func.func @transform_0(%arg0: i32, %arg1: i32) -> (i32, i32, i32) {
    %c0_i32 = arith.constant 0 : i32
    %c0_i32_0 = arith.constant 0 : i32
    return %arg0, %arg1, %c0_i32 : i32, i32, i32
  }
  func.func @transform_1(%arg0: i32, %arg1: i32) -> (i32, i32) {
    %c0_i32 = arith.constant 0 : i32
    %c0_i32_0 = arith.constant 0 : i32
    %c0_i32_1 = arith.constant 0 : i32
    return %c0_i32, %c0_i32_0 : i32, i32
  }
  func.func @transform_2(%arg0: i32, %arg1: i32) -> (i32, i32, i32) {
    %c0_i32 = arith.constant 0 : i32
    %c0_i32_0 = arith.constant 0 : i32
    %c0_i32_1 = arith.constant 0 : i32
    return %arg1, %c0_i32, %c0_i32_0 : i32, i32, i32
  }
  func.func @transform_3(%arg0: i32, %arg1: i32) -> (i32, i32) {
    %c0_i32 = arith.constant 0 : i32
    %c0_i32_0 = arith.constant 0 : i32
    %c0_i32_1 = arith.constant 0 : i32
    return %c0_i32, %c0_i32_0 : i32, i32
  }
  func.func @transform_4(%arg0: i32, %arg1: i32) -> (i32, i32) {
    %c0_i32 = arith.constant 0 : i32
    %c0_i32_0 = arith.constant 0 : i32
    %c0_i32_1 = arith.constant 0 : i32
    return %c0_i32, %c0_i32_0 : i32, i32
  }
  func.func @transform_5(%arg0: i32, %arg1: i32) -> (i32, i32, i32) {
    %c0_i32 = arith.constant 0 : i32
    %c0_i32_0 = arith.constant 0 : i32
    %c0_i32_1 = arith.constant 0 : i32
    return %arg0, %c0_i32, %c0_i32_0 : i32, i32, i32
  }
}

</mosaic_0001>

<llo_original>
// kernel: tpu_custom_call.1
$region0: #{tpu_custom_call.1}
  #allocation0 [shape = 'u32[]', space=smem, size = 0x4, offset = 0x4, fixed_abs, tag = 'smem constant byte address 0x4 - core index']
  #allocation1 [shape = 'u32[144,128]{1,0:T(1,128)}', space=vmem, size = 0x12000, scoped, tag = 'internal scratch']
  %s0 = inlined_call_operand.vmem [shape: bf16[2,64,128], index: 0, kind: input, shape index: {}]
  %s1 = inlined_call_operand.vmem [shape: bf16[128,32], index: 1, kind: input, shape index: {}]
  %s2 = inlined_call_operand.hbm [shape: f32[2,2,32], index: 2, kind: input, shape index: {}]
  %s3 = inlined_call_operand.vmem [shape: f32[16,32], index: 3, kind: input, shape index: {}]
  %s4 = inlined_call_operand.vmem [shape: f32[4,32], index: 4, kind: input, shape index: {}]
  %s5 = inlined_call_operand.vmem [shape: f32[2,68,32], index: 5, kind: output, shape index: {}]
  %s6 = sld [smem:[#allocation0]]
  $region61: #{tpu_custom_call.1} parent=0
    _
  %s8 = ssub.s32 1, %s6
  %s9 = scalar_select 0, %s8, %s6
  $region1: #{tpu_custom_call.1} parent=0
    #allocation2 [shape = 'u8[2048]{0}', space=vmem, size = 0x800, scoped, tag = 'input window, operand 2']
    #allocation3 [shape = 's32[2]{0}', space=sflag, size = 0x8, scoped, tag = 'scoped memory for tpu_custom_call.1']
    %10 = vsyncpa [#allocation3], 0
    %s11 = scalar_lea.sflag [#allocation3], 1
    %12 = vsyncpa %s11, 0
    loop: start=0, step=1, limit=6
    $region2: #{tpu_custom_call.1} parent=1 // loop_pre_header
      _
    $region3: #{tpu_custom_call.1} parent=1 // loop_header
      %s14 = sphi 0, %s18
      %p15 = scmp.ge.s32.totalorder %s14, 6
      %s21 = sphi 0, %s33
      %s22 = sphi 0, %s29
      %s23 = sphi 0, %s21
      %s24 = sphi 0, %s22
      %s25 = sphi 0, %s23
      %s26 = sphi 0, %s24
      %s38 = sphi 0, %s40
      %s41 = sphi 0, %s38
      %s42 = sphi 0, %s41
      %s58 = sphi 0, %s42
      %s62 = sphi 0, %s62
      %s64 = sphi 0, %s62
      %s65 = sphi 0, %s64
      %s79 = sphi 0, %s65
      %s85 = sphi 0, %s87
      %s88 = sphi 0, %s85
      %s89 = sphi 0, %s88
      %s105 = sphi 0, %s89
      %s109 = sphi 0, %s109
      %s111 = sphi 0, %s109
      %s112 = sphi 0, %s111
      %s126 = sphi 0, %s112
      %s130 = sphi 0, %s130
      %s132 = sphi 0, %s130
      %s133 = sphi 0, %s132
      %s147 = sphi 0, %s133
      %s153 = sphi 0, %s155
      %s156 = sphi 0, %s153
      %s157 = sphi 0, %s156
      %s173 = sphi 0, %s157
    $region4: #{tpu_custom_call.1} parent=1 // loop_header_branch
      %17 = sbr.rel (%p15) target = $region8
    $region5: #{tpu_custom_call.1} parent=1 // loop_body
      %s19 = ssub.s32 %s14, 1
      %s20 = ssub.s32 %s14, 2
      %s27 = sadd.s32 1, %s22
      %p28 = scmp.ge.s32.totalorder %s27, 2
      %s29 = scalar_select %p28, 0, %s27
      %s30 = sadd.s32 1, %s21
      %s31 = scalar_select %p28, %s30, %s21
      %p32 = scmp.ge.s32.totalorder %s31, 2
      %s33 = scalar_select %p32, 0, %s31
      %s34 = ssub.s32 %s21, %s33
      %s35 = ssub.s32 %s22, %s29
      %s36 = sor.u32 %s34, %s35
      %p37 = scmp.eq.s32.totalorder %s36, 0
      %s39 = sadd.s32 %s38, 1
      %s40 = scalar_select %p37, %s38, %s39
      %p43 = pneg %p37
      %p44 = scmp.eq.s32.totalorder %s14, 3
      %p45 = por %p43, %p44
      %p46 = scmp.ne.s32.totalorder %s38, %s41
      %p47 = scmp.eq.s32.totalorder %s14, 0
      %p48 = por %p46, %p47
      %p49 = scmp.ne.s32.totalorder %s38, %s41
      %p50 = scmp.eq.s32.totalorder %s19, 3
      %p51 = por %p49, %p50
      %p52 = scmp.ne.s32.totalorder %s41, %s42
      %p53 = scmp.eq.s32.totalorder %s19, 0
      %p54 = por %p52, %p53
      %p55 = scmp.ne.s32.totalorder %s41, %s42
      %p56 = scmp.eq.s32.totalorder %s20, 3
      %p57 = por %p55, %p56
      %p59 = scmp.ne.s32.totalorder %s42, %s58
      %p60 = scmp.eq.s32.totalorder %s20, 0
      %p61 = por %p59, %p60
      %s63 = sadd.s32 %s62, 1
      %p66 = scmp.eq.s32.totalorder %s14, 3
      %p67 = scmp.ne.s32.totalorder %s62, %s64
      %p68 = scmp.eq.s32.totalorder %s14, 0
      %p69 = por %p67, %p68
      %p70 = scmp.ne.s32.totalorder %s62, %s64
      %p71 = scmp.eq.s32.totalorder %s19, 3
      %p72 = por %p70, %p71
      %p73 = scmp.ne.s32.totalorder %s64, %s65
      %p74 = scmp.eq.s32.totalorder %s19, 0
      %p75 = por %p73, %p74
      %p76 = scmp.ne.s32.totalorder %s64, %s65
      %p77 = scmp.eq.s32.totalorder %s20, 3
      %p78 = por %p76, %p77
      %p80 = scmp.ne.s32.totalorder %s65, %s79
      %p81 = scmp.eq.s32.totalorder %s20, 0
      %p82 = por %p80, %p81
      %s83 = ssub.s32 %s22, %s29
      %p84 = scmp.eq.s32.totalorder %s83, 0
      %s86 = sadd.s32 %s85, 1
      %s87 = scalar_select %p84, %s85, %s86
      %p90 = pneg %p84
      %p91 = scmp.eq.s32.totalorder %s14, 3
      %p92 = por %p90, %p91
      %p93 = scmp.ne.s32.totalorder %s85, %s88
      %p94 = scmp.eq.s32.totalorder %s14, 0
      %p95 = por %p93, %p94
      %p96 = scmp.ne.s32.totalorder %s85, %s88
      %p97 = scmp.eq.s32.totalorder %s19, 3
      %p98 = por %p96, %p97
      %p99 = scmp.ne.s32.totalorder %s88, %s89
      %p100 = scmp.eq.s32.totalorder %s19, 0
      %p101 = por %p99, %p100
      %p102 = scmp.ne.s32.totalorder %s88, %s89
      %p103 = scmp.eq.s32.totalorder %s20, 3
      %p104 = por %p102, %p103
      %p106 = scmp.ne.s32.totalorder %s89, %s105
      %p107 = scmp.eq.s32.totalorder %s20, 0
      %p108 = por %p106, %p107
      %s110 = sadd.s32 %s109, 1
      %p113 = scmp.eq.s32.totalorder %s14, 3
      %p114 = scmp.ne.s32.totalorder %s109, %s111
      %p115 = scmp.eq.s32.totalorder %s14, 0
      %p116 = por %p114, %p115
      %p117 = scmp.ne.s32.totalorder %s109, %s111
      %p118 = scmp.eq.s32.totalorder %s19, 3
      %p119 = por %p117, %p118
      %p120 = scmp.ne.s32.totalorder %s111, %s112
      %p121 = scmp.eq.s32.totalorder %s19, 0
      %p122 = por %p120, %p121
      %p123 = scmp.ne.s32.totalorder %s111, %s112
      %p124 = scmp.eq.s32.totalorder %s20, 3
      %p125 = por %p123, %p124
      %p127 = scmp.ne.s32.totalorder %s112, %s126
      %p128 = scmp.eq.s32.totalorder %s20, 0
      %p129 = por %p127, %p128
      %s131 = sadd.s32 %s130, 1
      %p134 = scmp.eq.s32.totalorder %s14, 3
      %p135 = scmp.ne.s32.totalorder %s130, %s132
      %p136 = scmp.eq.s32.totalorder %s14, 0
      %p137 = por %p135, %p136
      %p138 = scmp.ne.s32.totalorder %s130, %s132
      %p139 = scmp.eq.s32.totalorder %s19, 3
      %p140 = por %p138, %p139
      %p141 = scmp.ne.s32.totalorder %s132, %s133
      %p142 = scmp.eq.s32.totalorder %s19, 0
      %p143 = por %p141, %p142
      %p144 = scmp.ne.s32.totalorder %s132, %s133
      %p145 = scmp.eq.s32.totalorder %s20, 3
      %p146 = por %p144, %p145
      %p148 = scmp.ne.s32.totalorder %s133, %s147
      %p149 = scmp.eq.s32.totalorder %s20, 0
      %p150 = por %p148, %p149
      %s151 = ssub.s32 %s21, %s33
      %p152 = scmp.eq.s32.totalorder %s151, 0
      %s154 = sadd.s32 %s153, 1
      %s155 = scalar_select %p152, %s153, %s154
      %p158 = pneg %p152
      %p159 = scmp.eq.s32.totalorder %s14, 3
      %p160 = por %p158, %p159
      %p161 = scmp.ne.s32.totalorder %s153, %s156
      %p162 = scmp.eq.s32.totalorder %s14, 0
      %p163 = por %p161, %p162
      %p164 = scmp.ne.s32.totalorder %s153, %s156
      %p165 = scmp.eq.s32.totalorder %s19, 3
      %p166 = por %p164, %p165
      %p167 = scmp.ne.s32.totalorder %s156, %s157
      %p168 = scmp.eq.s32.totalorder %s19, 0
      %p169 = por %p167, %p168
      %p170 = scmp.ne.s32.totalorder %s156, %s157
      %p171 = scmp.eq.s32.totalorder %s20, 3
      %p172 = por %p170, %p171
      %p174 = scmp.ne.s32.totalorder %s157, %s173
      %p175 = scmp.eq.s32.totalorder %s20, 0
      %p176 = por %p174, %p175
      %p177 = scmp.le.s32.totalorder 1, %s14
      %p178 = scmp.lt.s32.totalorder %s14, 5
      %p179 = pnand %p177, %p178
      %p180 = pneg %p179
      // Predicated region
      $region9: #{tpu_custom_call.1} parent=5 // pred_check
        _
      $region10: #{tpu_custom_call.1} parent=5 // pred_check_branch
        %182 = sbr.rel (%p179) target = $region12
      $region11: #{tpu_custom_call.1} parent=5 // pred_region
        %s183 = ssub.s32 %s14, 1
        // Predicated region
        $region13: #{tpu_custom_call.1} parent=11 // pred_check
          %p184 = pneg %p75
        $region14: #{tpu_custom_call.1} parent=11 // pred_check_branch
          %186 = sbr.rel (%p184) target = $region16
        $region15: #{tpu_custom_call.1} parent=11 // pred_region
          _
        $region16: #{tpu_custom_call.1} parent=11 // pred_fallthru
          _
        // Predicated region
        $region17: #{tpu_custom_call.1} parent=11 // pred_check
          %p187 = pneg %p122
        $region18: #{tpu_custom_call.1} parent=11 // pred_check_branch
          %189 = sbr.rel (%p187) target = $region20
        $region19: #{tpu_custom_call.1} parent=11 // pred_region
          _
        $region20: #{tpu_custom_call.1} parent=11 // pred_fallthru
          _
        // Predicated region
        $region21: #{tpu_custom_call.1} parent=11 // pred_check
          %p190 = pneg %p143
        $region22: #{tpu_custom_call.1} parent=11 // pred_check_branch
          %192 = sbr.rel (%p190) target = $region24
        $region23: #{tpu_custom_call.1} parent=11 // pred_region
          _
        $region24: #{tpu_custom_call.1} parent=11 // pred_fallthru
          _
      $region12: #{tpu_custom_call.1} parent=5 // pred_fallthru
        _
      %p193 = scmp.lt.s32.totalorder %s14, 4
      // Predicated region
      $region25: #{tpu_custom_call.1} parent=5 // pred_check
        %p194 = pneg %p193
      $region26: #{tpu_custom_call.1} parent=5 // pred_check_branch
        %196 = sbr.rel (%p194) target = $region28
      $region27: #{tpu_custom_call.1} parent=5 // pred_region
        // Predicated region
        $region29: #{tpu_custom_call.1} parent=27 // pred_check
          %p197 = pneg %p48
        $region30: #{tpu_custom_call.1} parent=27 // pred_check_branch
          %199 = sbr.rel (%p197) target = $region32
        $region31: #{tpu_custom_call.1} parent=27 // pred_region
          %s200 = smul.u32 4, %s22
          %p201 = scmp.lt.s32.totalorder %s21, 1
          %s202 = scalar_select %p201, %s21, 1
          %p203 = scmp.lt.s32.totalorder %s200, 7
          %s204 = scalar_select %p203, %s200, 7
          %s205 = smul.addr %s202, 8
          %s206 = sadd.s32 %s204, %s205
          %s207 = smul.addr %s206, 4
          %s208 = scalar_lea.vmem %s0, %s207
          %s209 = smul.u32 4, %s22
        $region32: #{tpu_custom_call.1} parent=27 // pred_fallthru
          _
        // Predicated region
        $region33: #{tpu_custom_call.1} parent=27 // pred_check
          %p210 = pneg %p95
        $region34: #{tpu_custom_call.1} parent=27 // pred_check_branch
          %212 = sbr.rel (%p210) target = $region36
        $region35: #{tpu_custom_call.1} parent=27 // pred_region
          %s213 = sand.u32 %s85, 1
          %s214 = scalar_lea.sflag [#allocation3], %s213
          %s215 = sand.u32 %s85, 1
          %s216 = smul.addr %s215, 2
          %s217 = scalar_lea.vmem [#allocation2], %s216
          %s219 = ssub.s32 32, 32
          %220 = vsyncadd %s214, %s219
          %s221 = smul.addr %s22, 32
          %s222 = scalar_lea.hbm %s2, %s221
          %s224 = sshll.u32 %s217, 4
          %s225 = int_to_ptr.vmem [resolvable:$true] %s224
          %227 = dma.hbm_to_vmem [thread:$0]  %s222, 32, %s225, %s214
        $region36: #{tpu_custom_call.1} parent=27 // pred_fallthru
          _
      $region28: #{tpu_custom_call.1} parent=5 // pred_fallthru
        _
      %p228 = scmp.le.s32.totalorder 1, %s14
      %p229 = scmp.lt.s32.totalorder %s14, 5
      %p230 = pnand %p228, %p229
      %p231 = pneg %p230
      // Predicated region
      $region37: #{tpu_custom_call.1} parent=5 // pred_check
        _
      $region38: #{tpu_custom_call.1} parent=5 // pred_check_branch
        %233 = sbr.rel (%p230) target = $region40
      $region39: #{tpu_custom_call.1} parent=5 // pred_region
        %s234 = ssub.s32 %s14, 1
        %s235 = sand.u32 %s88, 1
        %s236 = scalar_lea.sflag [#allocation3], %s235
        %s237 = sand.u32 %s88, 1
        %s238 = smul.addr %s237, 2
        %s239 = scalar_lea.vmem [#allocation2], %s238
        // Predicated region
        $region41: #{tpu_custom_call.1} parent=39 // pred_check
          %p240 = pneg %p101
        $region42: #{tpu_custom_call.1} parent=39 // pred_check_branch
          %242 = sbr.rel (%p240) target = $region44
        $region43: #{tpu_custom_call.1} parent=39 // pred_region
          %243 = dma.done %s236, 32
        $region44: #{tpu_custom_call.1} parent=39 // pred_fallthru
          _
        %s244 = smul.u32 4, %s24
        %p245 = scmp.lt.s32.totalorder %s23, 1
        %s246 = scalar_select %p245, %s23, 1
        %p247 = scmp.lt.s32.totalorder %s244, 7
        %s248 = scalar_select %p247, %s244, 7
        %s249 = smul.addr %s246, 8
        %s250 = sadd.s32 %s248, %s249
        %s251 = smul.addr %s250, 4
        %s252 = scalar_lea.vmem %s0, %s251
        %p253 = pneg %p54
        %p254 = pneg %p51
        %p255 = pneg %p75
        %p256 = pneg %p72
        %s257 = sand.u32 %s88, 1
        %s258 = scalar_lea.sflag [#allocation3], %s257
        %s259 = sand.u32 %s88, 1
        %s260 = smul.addr %s259, 2
        %s261 = scalar_lea.vmem [#allocation2], %s260
        %p262 = pneg %p101
        %p263 = pneg %p98
        %p264 = pneg %p122
        %p265 = pneg %p119
        %p266 = pneg %p143
        %p267 = pneg %p140
        %p268 = pneg %p169
        %p269 = pneg %p166
        %p270 = scmp.lt.s32.totalorder %s23, 1
        %s271 = scalar_select %p270, %s23, 1
        %s272 = smul.addr %s271, 9
        %s273 = smul.addr %s272, 8
        %s274 = scalar_lea.vmem %s5, %s273
        %s275 = smul.u32 4, %s24
        %p276 = scmp.lt.s32.totalorder %s23, 1
        %s277 = scalar_select %p276, %s23, 1
        %p278 = scmp.lt.s32.totalorder %s275, 7
        %s279 = scalar_select %p278, %s275, 7
        %s280 = smul.addr %s277, 8
        %s281 = sadd.s32 %s279, %s280
        %s282 = smul.addr %s281, 4
        %s283 = scalar_lea.vmem %s0, %s282
        %s284 = smul.u32 4, %s24
        %p285 = scmp.lt.s32.totalorder %s23, 1
        %s286 = scalar_select %p285, %s23, 1
        %s287 = smul.addr %s286, 9
        %s288 = smul.addr %s287, 8
        %s289 = scalar_lea.vmem %s5, %s288
        %p291 = scmp.eq.s32.totalorder %s24, 0
        // Predicated region
        $region45: #{tpu_custom_call.1} parent=39 // pred_check
          %p292 = pneg %p291
        $region46: #{tpu_custom_call.1} parent=39 // pred_check_branch
          %294 = sbr.rel (%p292) target = $region48
        $region47: #{tpu_custom_call.1} parent=39 // pred_region
          %v295 = vld [vmem:[%s4] sm:$0xf]
          %vm296 = vcmask 257024
          %297 = vst.msk [vmem:[%s289] sm:$0xf] %vm296, %v295
        $region48: #{tpu_custom_call.1} parent=39 // pred_fallthru
          _
        %v298 = vld [vmem:[%s283] sm:$0xf]
        %v299 = vld [vmem:[%s283 + $0x4] sm:$0xf]
        %v300 = vld [vmem:[%s283 + $0x8] sm:$0xf]
        %v301 = vld [vmem:[%s283 + $0xc] sm:$0xf]
        %v302 = vld [vmem:[%s1] sm:$0xf]
        %v303 = vld [vmem:[%s1 + $0x4] sm:$0xf]
        %v304 = vld [vmem:[%s1 + $0x8] sm:$0xf]
        %v305 = vld [vmem:[%s1 + $0xc] sm:$0xf]
        %v306 = vld [vmem:[%s1 + $0x10] sm:$0xf]
        %v307 = vld [vmem:[%s1 + $0x14] sm:$0xf]
        %v308 = vld [vmem:[%s1 + $0x18] sm:$0xf]
        %v309 = vld [vmem:[%s1 + $0x1c] sm:$0xf]
        %v310 = vld [vmem:[%s1 + $0x20] sm:$0xf]
        %v311 = vld [vmem:[%s1 + $0x24] sm:$0xf]
        %v312 = vld [vmem:[%s1 + $0x28] sm:$0xf]
        %v313 = vld [vmem:[%s1 + $0x2c] sm:$0xf]
        %v314 = vld [vmem:[%s1 + $0x30] sm:$0xf]
        %v315 = vld [vmem:[%s1 + $0x34] sm:$0xf]
        %v316 = vld [vmem:[%s1 + $0x38] sm:$0xf]
        %v317 = vld [vmem:[%s1 + $0x3c] sm:$0xf]
        %v322 = vunpack.c.l.b16 %v298
        %v323 = vunpack.c.l.b16 %v299
        %v324 = vunpack.c.l.b16 %v300
        %v325 = vunpack.c.l.b16 %v301
        %v326 = vpack.c.b16 %v323, %v322
        %v327 = vpack.c.b16 %v325, %v324
        %v346 = vunpack.c.l.b16 %v302
        %v347 = vunpack.c.l.b16 %v303
        %v348 = vunpack.c.l.b16 %v304
        %v349 = vunpack.c.l.b16 %v305
        %v350 = vunpack.c.l.b16 %v306
        %v351 = vunpack.c.l.b16 %v307
        %v352 = vunpack.c.l.b16 %v308
        %v353 = vunpack.c.l.b16 %v309
        %v354 = vunpack.c.l.b16 %v310
        %v355 = vunpack.c.l.b16 %v311
        %v356 = vunpack.c.l.b16 %v312
        %v357 = vunpack.c.l.b16 %v313
        %v358 = vunpack.c.l.b16 %v314
        %v359 = vunpack.c.l.b16 %v315
        %v360 = vunpack.c.l.b16 %v316
        %v361 = vunpack.c.l.b16 %v317
        %v362 = vpack.c.b16 %v347, %v346
        %v363 = vpack.c.b16 %v349, %v348
        %v364 = vpack.c.b16 %v351, %v350
        %v365 = vpack.c.b16 %v353, %v352
        %v366 = vpack.c.b16 %v355, %v354
        %v367 = vpack.c.b16 %v357, %v356
        %v368 = vpack.c.b16 %v359, %v358
        %v369 = vpack.c.b16 %v361, %v360
        %378 = vmatprep.subr.bf16.mxu0 0
        %379 = vmatpush1.bf16.msra.mxu0 %v369
        %380 = vmatprep.subr.bf16.mxu0 0
        %381 = vmatpush1.bf16.msra.mxu0 %v368
        %382 = vmatprep.subr.bf16.mxu0 0
        %383 = vmatpush1.bf16.msra.mxu0 %v367
        %384 = vmatprep.subr.bf16.mxu0 0
        %385 = vmatpush1.bf16.msra.mxu0 %v366
        %386 = vmatprep.subr.bf16.mxu0 0
        %387 = vmatpush1.bf16.msra.mxu0 %v365
        %388 = vmatprep.subr.bf16.mxu0 0
        %389 = vmatpush1.bf16.msra.mxu0 %v364
        %390 = vmatprep.subr.bf16.mxu0 0
        %391 = vmatpush1.bf16.msra.mxu0 %v363
        %392 = vmatprep.subr.bf16.mxu0 0
        %393 = vmatpush1.bf16.msra.mxu0 %v362
        %394 = vmatprep.subr.bf16.mxu0 0
        %395 = vmatpush2.bf16.msra.mxu0 0
        %396 = vmatprep.subr.bf16.mxu0 0
        %397 = vmatpush2.bf16.msra.mxu0 0
        %398 = vmatprep.subr.bf16.mxu0 0
        %399 = vmatpush2.bf16.msra.mxu0 0
        %400 = vmatprep.subr.bf16.mxu0 0
        %401 = vmatpush2.bf16.msra.mxu0 0
        %402 = vmatprep.subr.bf16.mxu0 0
        %403 = vmatpush2.bf16.msra.mxu0 0
        %404 = vmatprep.subr.bf16.mxu0 0
        %405 = vmatpush2.bf16.msra.mxu0 0
        %406 = vmatprep.subr.bf16.mxu0 0
        %407 = vmatpush2.bf16.msra.mxu0 0
        %408 = vmatprep.subr.bf16.mxu0 0
        %409 = vmatpush2.bf16.msra.mxu0 0
        %410 = vmatprep.mubr.bf16.mxu0 0
        %411 = vmatmul.mubr.bf16.gmra.mxu0 %v326
        %v412 = vpop.f32.mrf.mxu0
        %v413 = vadd.f32 0.0, %v412
        %v414 = vpop.f32.mrf.mxu0
        %v415 = vpop.f32.mrf.mxu0
        %v416 = vadd.f32 0.0, %v415
        %v417 = vpop.f32.mrf.mxu0
        %418 = vmatprep.mubr.bf16.mxu0 0
        %419 = vmatmul.mubr.bf16.gmra.mxu0 %v327
        %v420 = vpop.f32.mrf.mxu0
        %v421 = vadd.f32 0.0, %v420
        %v422 = vpop.f32.mrf.mxu0
        %v423 = vpop.f32.mrf.mxu0
        %v424 = vadd.f32 0.0, %v423
        %v425 = vpop.f32.mrf.mxu0
        %426 = vdwg.mxu0
        %v427 = vld [vmem:[%s239] sm:$0x3]
        %v430 = vunpack.c.l.s4 1966171168
        %v431 = vunpack.c.0.s8 %v430
        %v432 = vlaneseq
        %v433 = vshrl.u32 %v432, 7
        %v434 = vsub.s32 %v431, %v433
        %v435 = vrot.slane %v427, %v434
        %v436 = vcombine.high %v435, %v435
        %v438 = vunpack.c.l.s4 1966171168
        %v439 = vunpack.c.0.s8 %v438
        %v440 = vlaneseq
        %v441 = vshrl.u32 %v440, 7
        %v442 = vsub.s32 %v439, %v441
        %v443 = vrot.slane %v435, %v442
        %v445 = vunpack.c.l.s4 1966171168
        %v446 = vunpack.c.0.s8 %v445
        %v447 = vlaneseq
        %v448 = vshrl.u32 %v447, 7
        %v449 = vsub.s32 %v446, %v448
        %v450 = vrot.slane %v436, %v449
        %v451 = vlaneseq
        %v452 = vshrl.u32 %v451, 7
        %v453 = vsub.s32 0, %v452
        %v454 = vrot.slane %v443, %v453
        %v455 = vlaneseq
        %v456 = vshrl.u32 %v455, 7
        %v457 = vsub.s32 0, %v456
        %v458 = vrot.slane %v450, %v457
        %v461 = vadd.f32 %v413, %v454
        %v462 = vadd.f32 %v416, %v454
        %v463 = vadd.f32 %v421, %v458
        %v464 = vadd.f32 %v424, %v458
        %v465 = vld [vmem:[%s3] sm:$0xff]
        %v466 = vld [vmem:[%s3 + $0x8] sm:$0xff]
        %v467 = vadd.f32 %v461, %v465
        %v468 = vadd.f32 %v462, %v466
        %v469 = vadd.f32 %v463, %v465
        %v470 = vadd.f32 %v464, %v466
        %s471 = smul.u32 %s24, 32
        %s472 = sadd.s32 %s471, 4
        %s473 = scalar_lea.vmem %s289, %s472
        %vm474 = vcmask 261120
        %475 = vst.msk [vmem:[%s473] sm:$0xff] %vm474, %v467
        %476 = vst.msk [vmem:[%s473 + $0x8] sm:$0xff] %vm474, %v468
        %477 = vst.msk [vmem:[%s473 + $0x10] sm:$0xff] %vm474, %v469
        %478 = vst.msk [vmem:[%s473 + $0x18] sm:$0xff] %vm474, %v470
        %p479 = scmp.lt.s32.totalorder %s23, 1
        %s480 = scalar_select %p479, %s23, 1
        %s481 = smul.addr %s480, 9
        %s482 = smul.addr %s481, 8
        %s483 = scalar_lea.vmem %s5, %s482
        // Predicated region
        $region49: #{tpu_custom_call.1} parent=39 // pred_check
          %p484 = pneg %p166
        $region50: #{tpu_custom_call.1} parent=39 // pred_check_branch
          %486 = sbr.rel (%p484) target = $region52
        $region51: #{tpu_custom_call.1} parent=39 // pred_region
          _
        $region52: #{tpu_custom_call.1} parent=39 // pred_fallthru
          _
      $region40: #{tpu_custom_call.1} parent=5 // pred_fallthru
        _
      %p487 = scmp.le.s32.totalorder 2, %s14
      // Predicated region
      $region53: #{tpu_custom_call.1} parent=5 // pred_check
        %p488 = pneg %p487
      $region54: #{tpu_custom_call.1} parent=5 // pred_check_branch
        %490 = sbr.rel (%p488) target = $region56
      $region55: #{tpu_custom_call.1} parent=5 // pred_region
        %s491 = ssub.s32 %s14, 2
        // Predicated region
        $region57: #{tpu_custom_call.1} parent=55 // pred_check
          %p492 = pneg %p172
        $region58: #{tpu_custom_call.1} parent=55 // pred_check_branch
          %494 = sbr.rel (%p492) target = $region60
        $region59: #{tpu_custom_call.1} parent=55 // pred_region
          %p495 = scmp.lt.s32.totalorder %s25, 1
          %s496 = scalar_select %p495, %s25, 1
          %s497 = smul.addr %s496, 9
          %s498 = smul.addr %s497, 8
          %s499 = scalar_lea.vmem %s5, %s498
        $region60: #{tpu_custom_call.1} parent=55 // pred_fallthru
          _
      $region56: #{tpu_custom_call.1} parent=5 // pred_fallthru
        _
    $region6: #{tpu_custom_call.1} parent=1 // loop_footer
      %s18 = sadd.s32 1, %s14
    $region7: #{tpu_custom_call.1} parent=1 // loop_footer_branch
      %13 = sbr.rel target = $region3
    $region8: #{tpu_custom_call.1} parent=1 // loop_exit
      _
    %500 = vsyncpa [#allocation3], 1
    %s501 = scalar_lea.sflag [#allocation3], 1
    %502 = vsyncpa %s501, 1

</llo_original>
